<compile_context>
chip_gen: v5e
topology: v5e:2x2
jax: 0.10.0
libtpu: 0.0.40
codegen_flags: <defaults>
</compile_context>

<pallas_src>
import functools

import jax
import jax.numpy as jnp
import numpy as np
from jax.experimental import pallas as pl
from jax.experimental.pallas import tpu as pltpu


def _focal_loss_kernel(pred_ref, target_ref, loss_ref, valid_ref, *,
                       num_classes, ignore_label, gamma, alpha,
                       tiles_per_split, tile_n, n_cols):
    s = pl.program_id(0)
    t = pl.program_id(1)

    @pl.when(t == 0)
    def _():
        loss_ref[...] = jnp.zeros_like(loss_ref)
        valid_ref[...] = jnp.zeros_like(valid_ref)

    pred = pred_ref[...].astype(jnp.float32)            # (B, C, TN)
    target = target_ref[...].astype(jnp.int32)          # (B, TN)

    # Logical (unclamped) tile index -> global column positions.  This masks
    # both the ragged tail of the last tile and any clamped duplicate tiles,
    # so the wrapper never has to pad pred or target.
    tile_idx = s * tiles_per_split + t
    lane = jax.lax.broadcasted_iota(jnp.int32, (1, tile_n), 1)      # (1, TN)
    in_bounds = (tile_idx * tile_n + lane) < n_cols                  # (1, TN)

    valid = jnp.logical_and(target != ignore_label, in_bounds)       # (B, TN)
    tgt = jnp.clip(target, 0, num_classes - 1)                       # (B, TN)

    # One-hot over the class (sublane) axis via a small (C, TN) iota
    # broadcast against the target (avoids a full (B,C,TN) i32 iota).
    class_ids = jax.lax.broadcasted_iota(jnp.int32, (num_classes, tile_n), 0)
    one_hot = class_ids[None] == tgt[:, None, :]                     # (B, C, TN)

    # Softmax over the class axis; reciprocal-multiply instead of a
    # per-element divide.
    m = jnp.max(pred, axis=1, keepdims=True)
    e = jnp.exp(pred - m)
    denom_inv = pl.reciprocal(jnp.sum(e, axis=1, keepdims=True), approx=False)
    probs = e * denom_inv

    pt = jnp.where(one_hot, probs, 1.0 - probs)
    omp = 1.0 - pt

    # Focal weight with integer-gamma fast paths (avoid generic pow).
    if gamma == 0.0:
        focal_w = jnp.ones_like(omp)
    elif gamma == 1.0:
        focal_w = omp
    elif float(gamma).is_integer() and 2.0 <= gamma <= 8.0:
        focal_w = omp
        for _ in range(int(gamma) - 1):
            focal_w = focal_w * omp
    else:
        focal_w = omp ** gamma

    # Sign folded into the alpha select (saves a full-size negate).
    alpha_signed = jnp.where(one_hot,
                             jnp.float32(-alpha), jnp.float32(-(1.0 - alpha)))
    loss = alpha_signed * focal_w * jnp.log(pt + 1e-8)
    # where-select (not multiply) so garbage columns in ragged / duplicated
    # tiles (possibly NaN) and ignore-label pixels contribute exactly 0.
    loss = jnp.where(valid[:, None, :], loss, 0.0)

    # Lane-preserving accumulation into resident output blocks (batch-only
    # reductions are pure VPU adds; the cross-lane reduce happens once in XLA).
    loss_ref[...] += jnp.sum(loss, axis=0, keepdims=True)
    valid_ref[...] += jnp.sum(valid.astype(jnp.float32), axis=0)[None, None, :]


def _tpu_generation_params():
    """(num_splits, vmem_limit_bytes, vmem_budget_bytes) per TPU generation."""
    try:
        cap = int(pltpu.get_tpu_info().vmem_capacity_bytes)
    except Exception:
        cap = None
    if cap is None:
        # Unknown part: conservative everywhere.
        return 1, 40 * 1024 * 1024, 14 * 1024 * 1024
    if cap <= 80 * 1024 * 1024:
        # v7x-class: 64 MiB physical VMEM per TC, 2 TensorCores per chip.
        return 2, 44 * 1024 * 1024, 16 * 1024 * 1024
    # v5e / v6e: 128 MiB VMEM, single TensorCore.
    return 1, 64 * 1024 * 1024, 28 * 1024 * 1024


def focal_loss(pred, target, *, ignore_label, gamma=2.0, alpha=0.25,
               reduction="mean", tile_n=None, num_splits=None,
               vmem_budget_bytes=None, vmem_limit_bytes=None):
    b, c, h, w = pred.shape
    n = h * w

    pred_r = pred.reshape(b, c, n)
    target_r = target.reshape(b, n)
    if not jnp.issubdtype(target_r.dtype, jnp.integer):
        target_r = target_r.astype(jnp.int32)

    auto_splits, auto_limit, auto_budget = _tpu_generation_params()
    if num_splits is None:
        num_splits = auto_splits
    if vmem_limit_bytes is None:
        vmem_limit_bytes = auto_limit
    if vmem_budget_bytes is None:
        vmem_budget_bytes = auto_budget

    # --- tile_n from the VMEM budget: double-buffered inputs + ~10 live f32
    #     (B,C,TN) intermediates, 25% safety margin, capped at 2048 columns.
    if tile_n is None:
        p_item = jnp.dtype(pred_r.dtype).itemsize
        t_item = jnp.dtype(target_r.dtype).itemsize
        per_col = (b * c * (2 * p_item + 10 * 4)   # pred (x2 buf) + f32 temps
                   + b * (2 * t_item + 4)          # target (x2 buf) + valid
                   + (c + 1) * 4)                  # resident partial outputs
        tile_n = int(vmem_budget_bytes / 1.25) // per_col
    if n <= 128 or tile_n >= n:
        tile_n = n                                  # single full-width tile
    else:
        tile_n = max(128, min(int(tile_n), 2048))
        tile_n = (tile_n // 128) * 128

    total_tiles = pl.cdiv(n, tile_n)
    num_splits = max(1, min(num_splits, total_tiles))
    tiles_per_split = pl.cdiv(total_tiles, num_splits)

    kernel = functools.partial(
        _focal_loss_kernel,
        num_classes=c, ignore_label=ignore_label, gamma=gamma, alpha=alpha,
        tiles_per_split=tiles_per_split, tile_n=tile_n, n_cols=n)

    # Clamp the block index so DMAs never start past the array end; the
    # in-kernel column mask zeroes any duplicated / out-of-range columns.
    def pred_idx(s, t):
        return (0, 0, jnp.minimum(s * tiles_per_split + t, total_tiles - 1))

    def tgt_idx(s, t):
        return (0, jnp.minimum(s * tiles_per_split + t, total_tiles - 1))

    loss_part, valid_part = pl.pallas_call(
        kernel,
        out_shape=(jax.ShapeDtypeStruct((num_splits, c, tile_n), jnp.float32),
                   jax.ShapeDtypeStruct((num_splits, 1, tile_n), jnp.float32)),
        grid_spec=pltpu.PrefetchScalarGridSpec(
            num_scalar_prefetch=0,
            grid=(num_splits, tiles_per_split),
            in_specs=[
                pl.BlockSpec((b, c, tile_n), pred_idx),
                pl.BlockSpec((b, tile_n), tgt_idx),
            ],
            out_specs=[
                pl.BlockSpec((1, c, tile_n), lambda s, t: (s, 0, 0)),
                pl.BlockSpec((1, 1, tile_n), lambda s, t: (s, 0, 0)),
            ]),
        compiler_params=pltpu.CompilerParams(
            dimension_semantics=(
                "parallel" if num_splits > 1 else "arbitrary", "arbitrary"),
            vmem_limit_bytes=vmem_limit_bytes),
    )(pred_r, target_r)

    # Single tiny cross-lane reduce, done once in XLA.
    loss_sum = jnp.sum(loss_part)
    valid_sum = jnp.sum(valid_part)

    if reduction == "mean":
        return loss_sum / (valid_sum + 1e-8)
    elif reduction == "sum":
        return loss_sum
    else:
        # TODO(synk): 'none'-style reduction (per-pixel loss.sum(1) output) not
        # implemented in this partial-sum-accumulating kernel.
        raise NotImplementedError("only 'mean' and 'sum' reductions supported")


def _focal_loss_reference(pred, target, *, ignore_label, gamma=2.0, alpha=0.25):
    b, c, h, w = pred.shape
    pred = pred.reshape(b, c, -1).astype(jnp.float32)
    target = target.reshape(b, -1)
    valid = (target != ignore_label).astype(jnp.float32)
    tgt = jnp.clip(target, 0, c - 1)
    one_hot = jax.nn.one_hot(tgt, c, axis=1)                  # (B, C, N)
    probs = jax.nn.softmax(pred, axis=1)
    pt = jnp.where(one_hot == 1, probs, 1.0 - probs)
    focal_w = (1.0 - pt) ** gamma
    alpha_w = jnp.where(one_hot == 1, alpha, 1.0 - alpha)
    loss = -alpha_w * focal_w * jnp.log(pt + 1e-8)
    loss = loss * valid[:, None, :]
    return loss.sum() / (valid.sum() + 1e-8)


if __name__ == "__main__":
    B, C, H, W = 2, 4, 16, 16
    IGNORE = 255

    key = jax.random.PRNGKey(0)
    k_pred, k_tgt, k_ign = jax.random.split(key, 3)

    pred = jax.random.normal(k_pred, (B, C, H, W), dtype=jnp.float32)
    target = jax.random.randint(k_tgt, (B, H, W), 0, C, dtype=jnp.int32)
    # mark ~20% of pixels as ignore_label
    ignore_mask = jax.random.uniform(k_ign, (B, H, W)) < 0.2
    target = jnp.where(ignore_mask, IGNORE, target)

    out = focal_loss(pred, target, ignore_label=IGNORE,
                     gamma=2.0, alpha=0.25, reduction="mean")
    out = jax.block_until_ready(out)

    ref = _focal_loss_reference(pred, target, ignore_label=IGNORE,
                                gamma=2.0, alpha=0.25)
    np.testing.assert_allclose(np.asarray(out), np.asarray(ref),
                               rtol=1e-4, atol=1e-5)
    print("KERNEL_OK")
</pallas_src>

<mosaic_0001>
module attributes {stable_mosaic.version = 11 : i64} {
  func.func @_focal_loss_kernel(%arg0: i32, %arg1: i32, %arg2: memref<2x4x256xf32, #tpu.memory_space<vmem>>, %arg3: memref<2x256xi32, #tpu.memory_space<vmem>>, %arg4: memref<1x4x256xf32, #tpu.memory_space<vmem>>, %arg5: memref<1x1x256xf32, #tpu.memory_space<vmem>>) attributes {dimension_semantics = [#tpu.dimension_semantics<arbitrary>, #tpu.dimension_semantics<arbitrary>], iteration_bounds = array<i64: 1, 1>, scalar_prefetch = 0 : i64, scratch_operands = 0 : i64, tpu.core_type = #tpu.core_type<tc>, window_params = [{transform_indices = @transform_0, window_bounds = array<i64: 2, 4, 256>}, {transform_indices = @transform_1, window_bounds = array<i64: 2, 256>}, {transform_indices = @transform_2, window_bounds = array<i64: 1, 4, 256>}, {transform_indices = @transform_3, window_bounds = array<i64: 1, 1, 256>}]} {
    %c0_i32 = arith.constant 0 : i32
    %0 = arith.cmpi eq, %arg1, %c0_i32 : i32
    %1 = arith.extui %0 : i1 to i32
    %c0_i32_0 = arith.constant 0 : i32
    %2 = arith.cmpi ne, %1, %c0_i32_0 : i32
    scf.if %2 {
      %cst_28 = arith.constant 0.000000e+00 : f32
      %68 = vector.broadcast %cst_28 : f32 to vector<1x4x256xf32>
      %c0_29 = arith.constant 0 : index
      %c0_30 = arith.constant 0 : index
      %c0_31 = arith.constant 0 : index
      %69 = vector.load %arg4[%c0_29, %c0_30, %c0_31] : memref<1x4x256xf32, #tpu.memory_space<vmem>>, vector<1x4x256xf32>
      tpu.vector_store %arg4[%c0_29, %c0_30, %c0_31], %68 {strides = array<i32>} : memref<1x4x256xf32, #tpu.memory_space<vmem>>, vector<1x4x256xf32>,
      %cst_32 = arith.constant 0.000000e+00 : f32
      %70 = vector.broadcast %cst_32 : f32 to vector<1x1x256xf32>
      %c0_33 = arith.constant 0 : index
      %c0_34 = arith.constant 0 : index
      %c0_35 = arith.constant 0 : index
      %71 = vector.load %arg5[%c0_33, %c0_34, %c0_35] : memref<1x1x256xf32, #tpu.memory_space<vmem>>, vector<1x1x256xf32>
      tpu.vector_store %arg5[%c0_33, %c0_34, %c0_35], %70 {strides = array<i32>} : memref<1x1x256xf32, #tpu.memory_space<vmem>>, vector<1x1x256xf32>,
    } else {
    }
    %c0 = arith.constant 0 : index
    %c0_1 = arith.constant 0 : index
    %c0_2 = arith.constant 0 : index
    %3 = vector.load %arg2[%c0, %c0_1, %c0_2] : memref<2x4x256xf32, #tpu.memory_space<vmem>>, vector<2x4x256xf32>
    %c0_3 = arith.constant 0 : index
    %c0_4 = arith.constant 0 : index
    %4 = vector.load %arg3[%c0_3, %c0_4] : memref<2x256xi32, #tpu.memory_space<vmem>>, vector<2x256xi32>
    %c1_i32 = arith.constant 1 : i32
    %5 = arith.muli %arg0, %c1_i32 : i32
    %6 = arith.addi %5, %arg1 : i32
    %7 = tpu.iota {dimensions = array<i32: 1>} : vector<1x256xi32>
    %c256_i32 = arith.constant 256 : i32
    %8 = arith.muli %6, %c256_i32 : i32
    %9 = vector.broadcast %8 : i32 to vector<1x256xi32>
    %10 = arith.addi %9, %7 : vector<1x256xi32>
    %c256_i32_5 = arith.constant 256 : i32
    %11 = vector.broadcast %c256_i32_5 : i32 to vector<1x256xi32>
    %12 = arith.cmpi slt, %10, %11 : vector<1x256xi32>
    %c255_i32 = arith.constant 255 : i32
    %13 = vector.broadcast %c255_i32 : i32 to vector<2x256xi32>
    %14 = arith.cmpi ne, %4, %13 : vector<2x256xi32>
    %15 = vector.broadcast %12 : vector<1x256xi1> to vector<2x256xi1>
    %16 = arith.andi %14, %15 : vector<2x256xi1>
    %c0_i32_6 = arith.constant 0 : i32
    %c3_i32 = arith.constant 3 : i32
    %17 = vector.broadcast %c0_i32_6 : i32 to vector<2x256xi32>
    %18 = arith.maxsi %17, %4 : vector<2x256xi32>
    %19 = vector.broadcast %c3_i32 : i32 to vector<2x256xi32>
    %20 = arith.minsi %19, %18 : vector<2x256xi32>
    %21 = tpu.iota {dimensions = array<i32: 0>} : vector<4x256xi32>
    %22 = vector.shape_cast %21 : vector<4x256xi32> to vector<1x4x256xi32>
    %23 = vector.shape_cast %20 : vector<2x256xi32> to vector<2x1x256xi32>
    %24 = vector.broadcast %22 : vector<1x4x256xi32> to vector<2x4x256xi32>
    %25 = vector.broadcast %23 : vector<2x1x256xi32> to vector<2x4x256xi32>
    %26 = arith.cmpi eq, %24, %25 : vector<2x4x256xi32>
    %cst = arith.constant dense<0xFF800000> : vector<2x256xf32>
    %27 = vector.multi_reduction <maximumf>, %3, %cst [1] : vector<2x4x256xf32> to vector<2x256xf32>
    %28 = vector.shape_cast %27 : vector<2x256xf32> to vector<2x1x256xf32>
    %29 = vector.broadcast %28 : vector<2x1x256xf32> to vector<2x4x256xf32>
    %30 = arith.subf %3, %29 : vector<2x4x256xf32>
    %31 = math.exp %30 : vector<2x4x256xf32>
    %cst_7 = arith.constant dense<0.000000e+00> : vector<2x256xf32>
    %32 = vector.multi_reduction <add>, %31, %cst_7 [1] : vector<2x4x256xf32> to vector<2x256xf32>
    %33 = vector.shape_cast %32 : vector<2x256xf32> to vector<2x1x256xf32>
    %34 = tpu.reciprocal %33 : vector<2x1x256xf32> -> vector<2x1x256xf32>
    %35 = vector.broadcast %34 : vector<2x1x256xf32> to vector<2x4x256xf32>
    %36 = arith.mulf %31, %35 : vector<2x4x256xf32>
    %cst_8 = arith.constant 1.000000e+00 : f32
    %37 = vector.broadcast %cst_8 : f32 to vector<2x4x256xf32>
    %38 = arith.subf %37, %36 : vector<2x4x256xf32>
    %39 = arith.select %26, %36, %38 : vector<2x4x256xi1>, vector<2x4x256xf32>
    %cst_9 = arith.constant 1.000000e+00 : f32
    %40 = vector.broadcast %cst_9 : f32 to vector<2x4x256xf32>
    %41 = arith.subf %40, %39 : vector<2x4x256xf32>
    %42 = arith.mulf %41, %41 : vector<2x4x256xf32>
    %cst_10 = arith.constant -2.500000e-01 : f32
    %cst_11 = arith.constant -7.500000e-01 : f32
    %43 = vector.broadcast %cst_10 : f32 to vector<2x4x256xf32>
    %44 = vector.broadcast %cst_11 : f32 to vector<2x4x256xf32>
    %45 = arith.select %26, %43, %44 : vector<2x4x256xi1>, vector<2x4x256xf32>
    %46 = arith.mulf %45, %42 : vector<2x4x256xf32>
    %cst_12 = arith.constant 9.99999993E-9 : f32
    %47 = vector.broadcast %cst_12 : f32 to vector<2x4x256xf32>
    %48 = arith.addf %39, %47 : vector<2x4x256xf32>
    %49 = math.log %48 : vector<2x4x256xf32>
    %50 = arith.mulf %46, %49 : vector<2x4x256xf32>
    %51 = vector.shape_cast %16 : vector<2x256xi1> to vector<2x1x256xi1>
    %cst_13 = arith.constant 0.000000e+00 : f32
    %52 = vector.shape_cast %51 : vector<2x1x256xi1> to vector<2x1x256xi1>
    %53 = vector.broadcast %52 : vector<2x1x256xi1> to vector<2x4x256xi1>
    %54 = vector.broadcast %cst_13 : f32 to vector<2x4x256xf32>
    %55 = arith.select %53, %50, %54 : vector<2x4x256xi1>, vector<2x4x256xf32>
    %c0_14 = arith.constant 0 : index
    %c0_15 = arith.constant 0 : index
    %c0_16 = arith.constant 0 : index
    %56 = vector.load %arg4[%c0_14, %c0_15, %c0_16] : memref<1x4x256xf32, #tpu.memory_space<vmem>>, vector<1x4x256xf32>
    %cst_17 = arith.constant dense<0.000000e+00> : vector<4x256xf32>
    %57 = vector.multi_reduction <add>, %55, %cst_17 [0] : vector<2x4x256xf32> to vector<4x256xf32>
    %58 = vector.shape_cast %57 : vector<4x256xf32> to vector<1x4x256xf32>
    %59 = arith.addf %56, %58 : vector<1x4x256xf32>
    %c0_18 = arith.constant 0 : index
    %c0_19 = arith.constant 0 : index
    %c0_20 = arith.constant 0 : index
    %60 = vector.load %arg4[%c0_18, %c0_19, %c0_20] : memref<1x4x256xf32, #tpu.memory_space<vmem>>, vector<1x4x256xf32>
    tpu.vector_store %arg4[%c0_18, %c0_19, %c0_20], %59 {strides = array<i32>} : memref<1x4x256xf32, #tpu.memory_space<vmem>>, vector<1x4x256xf32>,
    %c0_21 = arith.constant 0 : index
    %c0_22 = arith.constant 0 : index
    %c0_23 = arith.constant 0 : index
    %61 = vector.load %arg5[%c0_21, %c0_22, %c0_23] : memref<1x1x256xf32, #tpu.memory_space<vmem>>, vector<1x1x256xf32>
    %62 = arith.extui %16 : vector<2x256xi1> to vector<2x256xi32>
    %63 = arith.sitofp %62 : vector<2x256xi32> to vector<2x256xf32>
    %cst_24 = arith.constant dense<0.000000e+00> : vector<256xf32>
    %64 = vector.multi_reduction <add>, %63, %cst_24 [0] : vector<2x256xf32> to vector<256xf32>
    %65 = vector.shape_cast %64 : vector<256xf32> to vector<1x1x256xf32>
    %66 = arith.addf %61, %65 : vector<1x1x256xf32>
    %c0_25 = arith.constant 0 : index
    %c0_26 = arith.constant 0 : index
    %c0_27 = arith.constant 0 : index
    %67 = vector.load %arg5[%c0_25, %c0_26, %c0_27] : memref<1x1x256xf32, #tpu.memory_space<vmem>>, vector<1x1x256xf32>
    tpu.vector_store %arg5[%c0_25, %c0_26, %c0_27], %66 {strides = array<i32>} : memref<1x1x256xf32, #tpu.memory_space<vmem>>, vector<1x1x256xf32>,
    return
  }
  func.func @transform_0(%arg0: i32, %arg1: i32) -> (i32, i32, i32) {
    %c1_i32 = arith.constant 1 : i32
    %0 = arith.muli %arg0, %c1_i32 : i32
    %1 = arith.addi %0, %arg1 : i32
    %c0_i32 = arith.constant 0 : i32
    %2 = arith.minsi %1, %c0_i32 : i32
    %c0_i32_0 = arith.constant 0 : i32
    %c0_i32_1 = arith.constant 0 : i32
    %c0_i32_2 = arith.constant 0 : i32
    return %c0_i32_0, %c0_i32_1, %2 : i32, i32, i32
  }
  func.func @transform_1(%arg0: i32, %arg1: i32) -> (i32, i32) {
    %c1_i32 = arith.constant 1 : i32
    %0 = arith.muli %arg0, %c1_i32 : i32
    %1 = arith.addi %0, %arg1 : i32
    %c0_i32 = arith.constant 0 : i32
    %2 = arith.minsi %1, %c0_i32 : i32
    %c0_i32_0 = arith.constant 0 : i32
    %c0_i32_1 = arith.constant 0 : i32
    return %c0_i32_0, %2 : i32, i32
  }
  func.func @transform_2(%arg0: i32, %arg1: i32) -> (i32, i32, i32) {
    %c0_i32 = arith.constant 0 : i32
    %c0_i32_0 = arith.constant 0 : i32
    %c0_i32_1 = arith.constant 0 : i32
    return %arg0, %c0_i32, %c0_i32_0 : i32, i32, i32
  }
  func.func @transform_3(%arg0: i32, %arg1: i32) -> (i32, i32, i32) {
    %c0_i32 = arith.constant 0 : i32
    %c0_i32_0 = arith.constant 0 : i32
    %c0_i32_1 = arith.constant 0 : i32
    return %arg0, %c0_i32, %c0_i32_0 : i32, i32, i32
  }
}

</mosaic_0001>

<llo_original>
// kernel: tpu_custom_call.1
$region0: #{tpu_custom_call.1}
  #allocation0 [shape = 'u32[]', space=smem, size = 0x4, offset = 0x4, fixed_abs, tag = 'smem constant byte address 0x4 - core index']
  #allocation1 [shape = 'u32[72,128]{1,0:T(1,128)}', space=vmem, size = 0x9000, scoped, tag = 'internal scratch']
  %s0 = inlined_call_operand.hbm [shape: f32[2,4,256], index: 0, kind: input, shape index: {}]
  %s1 = inlined_call_operand.hbm [shape: s32[2,256], index: 1, kind: input, shape index: {}]
  %s2 = inlined_call_operand.hbm [shape: f32[1,4,256], index: 2, kind: output, shape index: {0}]
  %s3 = inlined_call_operand.hbm [shape: f32[1,1,256], index: 3, kind: output, shape index: {1}]
  %4 = xla_tuple %s2, %s3
  %s5 = sld [smem:[#allocation0]]
  $region38: #{tpu_custom_call.1} parent=0
    _
  %s7 = ssub.s32 1, %s5
  %s8 = scalar_select 0, %s7, %s5
  $region1: #{tpu_custom_call.1} parent=0
    #allocation2 [shape = 'u8[8192]{0}', space=vmem, size = 0x2000, scoped, tag = 'input window, operand 0, single buffered']
    #allocation3 [shape = 's32[1]{0}', space=sflag, size = 0x4, scoped, tag = 'scoped memory for tpu_custom_call.1']
    #allocation4 [shape = 's32[1]{0}', space=sflag, size = 0x4, scoped, tag = 'scoped memory for tpu_custom_call.1']
    #allocation5 [shape = 'u8[2048]{0}', space=vmem, size = 0x800, scoped, tag = 'input window, operand 1, single buffered']
    #allocation6 [shape = 's32[1]{0}', space=sflag, size = 0x4, scoped, tag = 'scoped memory for tpu_custom_call.1']
    #allocation7 [shape = 'u8[4096]{0}', space=vmem, size = 0x1000, scoped, tag = 'output window, operand 0, single buffered']
    #allocation8 [shape = 'u8[1024]{0}', space=vmem, size = 0x400, scoped, tag = 'output window, operand 1, single buffered']
    #allocation9 [shape = 's32[1]{0}', space=sflag, size = 0x4, scoped, tag = 'scoped memory for tpu_custom_call.1']
    %9 = vsyncpa [#allocation3], 0
    %10 = vsyncpa [#allocation6], 0
    %11 = vsyncpa [#allocation4], 0
    %12 = vsyncpa [#allocation9], 0
    // Predicated region
    $region2: #{tpu_custom_call.1} parent=1 // pred_check
      _
    $region3: #{tpu_custom_call.1} parent=1 // pred_check_branch
      %14 = sbr.rel (0) target = $region5
    $region4: #{tpu_custom_call.1} parent=1 // pred_region
      %s15 = sadd.s32 0, 0
      %p16 = scmp.lt.s32.totalorder %s15, 0
      %s17 = scalar_select %p16, %s15, 0
      %s18 = smul.u32 2, %s17
      %20 = vsyncadd [#allocation3], 0
      %s21 = smul.addr %s18, 4
      %s22 = scalar_lea.hbm %s0, %s21
      %s23 = sshll.u32 %s22, 4
      %s24 = int_to_ptr.hbm [resolvable:$true] %s23
      %s25 = sshll.u32 [#allocation2], 4
      %s26 = int_to_ptr.vmem [resolvable:$true] %s25
      %31 = dma.hbm_to_vmem [thread:$0]  %s24, 256, %s26, [#allocation3], 128, 128, 8
    $region5: #{tpu_custom_call.1} parent=1 // pred_fallthru
      _
    // Predicated region
    $region6: #{tpu_custom_call.1} parent=1 // pred_check
      _
    $region7: #{tpu_custom_call.1} parent=1 // pred_check_branch
      %33 = sbr.rel (0) target = $region9
    $region8: #{tpu_custom_call.1} parent=1 // pred_region
      %s34 = sadd.s32 0, 0
      %p35 = scmp.lt.s32.totalorder %s34, 0
      %s36 = scalar_select %p35, %s34, 0
      %s37 = smul.u32 2, %s36
      %39 = vsyncadd [#allocation6], 0
      %s40 = smul.addr %s37, 2
      %s41 = scalar_lea.hbm %s1, %s40
      %s43 = sshll.u32 %s41, 4
      %s44 = int_to_ptr.hbm [resolvable:$true] %s43
      %s45 = sshll.u32 [#allocation5], 4
      %s46 = int_to_ptr.vmem [resolvable:$true] %s45
      %48 = dma.hbm_to_vmem [thread:$0]  %s44, 64, %s46, [#allocation6]
    $region9: #{tpu_custom_call.1} parent=1 // pred_fallthru
      _
    // Predicated region
    $region10: #{tpu_custom_call.1} parent=1 // pred_check
      _
    $region11: #{tpu_custom_call.1} parent=1 // pred_check_branch
      %50 = sbr.rel (0) target = $region13
    $region12: #{tpu_custom_call.1} parent=1 // pred_region
      %52 = dma.done [#allocation3], 256
    $region13: #{tpu_custom_call.1} parent=1 // pred_fallthru
      _
    // Predicated region
    $region14: #{tpu_custom_call.1} parent=1 // pred_check
      _
    $region15: #{tpu_custom_call.1} parent=1 // pred_check_branch
      %54 = sbr.rel (0) target = $region17
    $region16: #{tpu_custom_call.1} parent=1 // pred_region
      %56 = dma.done [#allocation6], 64
    $region17: #{tpu_custom_call.1} parent=1 // pred_fallthru
      _
    %s57 = sadd.s32 0, 0
    %p58 = scmp.lt.s32.totalorder %s57, 0
    %s59 = scalar_select %p58, %s57, 0
    %s60 = smul.u32 2, %s59
    %s61 = sadd.s32 0, 0
    %p62 = scmp.lt.s32.totalorder %s61, 0
    %s63 = scalar_select %p62, %s61, 0
    %s64 = smul.u32 2, %s63
    %p65 = scmp.eq.s32.totalorder 0, 0
    // Predicated region
    $region18: #{tpu_custom_call.1} parent=1 // pred_check
      %p66 = pneg %p65
    $region19: #{tpu_custom_call.1} parent=1 // pred_check_branch
      %68 = sbr.rel (%p66) target = $region21
    $region20: #{tpu_custom_call.1} parent=1 // pred_region
      %69 = vst [vmem:[#allocation7] sm:$0xff] 0.0
      %v70 = vlaneseq
      %vm71 = vcmp.ge.s32.totalorder %v70, 0
      %vm72 = vcmp.lt.s32.totalorder %v70, 256
      %vm73 = vmand %vm71, %vm72
      %74 = vst.msk [vmem:[#allocation8] sm:$0x3] %vm73, 0.0
    $region21: #{tpu_custom_call.1} parent=1 // pred_fallthru
      _
    %v75 = vld [vmem:[#allocation2] sm:$0xff]
    %v76 = vld [vmem:[#allocation2 + $0x8] sm:$0xff]
    %v77 = vld [vmem:[#allocation5] sm:$0xf]
    %s78 = sadd.s32 0, 0
    %v79 = vlaneseq
    %v80 = vand.u32 %v79, 127
    %v81 = vadd.s32 %v80, 128
    %s82 = smul.u32 %s78, 256
    %v83 = vstv %s82
    %v84 = vadd.s32 %v83, %v80
    %v85 = vadd.s32 %v83, %v81
    %vm86 = vcmp.lt.s32.totalorder %v84, 256
    %vm87 = vcmp.lt.s32.totalorder %v85, 256
    %vm88 = vcmp.ne.s32.totalorder %v77, 255
    %v89 = vsel %vm86, 1, 0
    %v90 = vsel %vm87, 1, 0
    %vm91 = vcmp.eq.s32.totalorder %v89, 1
    %vm92 = vcmp.eq.s32.totalorder %v90, 1
    %v93 = vsel %vm91, 1, 0
    %v94 = vsel %vm92, 1, 0
    %v95 = vrot.slane %v94, 6
    %vm96 = vcmask 1041408
    %v97 = vsel %vm96, %v93, %v95
    %vm98 = vcmp.ne.s32.totalorder %v97, 0
    %vm99 = vmand %vm88, %vm98
    %vm100 = vcmp.gt.s32.totalorder %v77, 0
    %v101 = vsel %vm100, %v77, 0
    %vm102 = vcmp.lt.s32.totalorder %v101, 3
    %v103 = vsel %vm102, %v101, 3
    %v104 = vlaneseq
    %v105 = vshrl.u32 %v104, 7
    %v106 = vrot.slane %v103, 1
    %v107 = vrot.slane %v103, 2
    %v108 = vrot.slane %v103, 3
    %vm109 = vcmask 1040384
    %v110 = vsel %vm109, %v103, %v106
    %vm111 = vcmask 1042434
    %v112 = vsel %vm111, %v107, %v108
    %v113 = vsel %vm96, %v110, %v112
    %vm114 = vcmask 1041409
    %v115 = vsel %vm114, %v103, %v106
    %vm116 = vcmask 1043459
    %v117 = vsel %vm116, %v107, %v108
    %vm118 = vcmask 1042433
    %v119 = vsel %vm118, %v115, %v117
    %v120 = vrot.slane %v119, 1
    %v121 = vperm.slane %v113, 0
    %v122 = vperm.slane %v113, 1
    %v123 = vperm.slane %v120, 0
    %v124 = vperm.slane %v120, 1
    %vm125 = vcmp.eq.s32.totalorder %v105, %v121
    %vm126 = vcmp.eq.s32.totalorder %v105, %v122
    %vm127 = vcmp.eq.s32.totalorder %v105, %v123
    %vm128 = vcmp.eq.s32.totalorder %v105, %v124
    %131 = vst [vmem:[#allocation1] ss:$2 sm:$0xff] %v75
    %v132 = vld.sshfl [vmem:[#allocation1] sm:$0xff pattern:$0x75316420]
    %v133 = vld.sshfl [vmem:[#allocation1 + $0x8] sm:$0xff pattern:$0x75316420]
    %s134 = scalar_lea.vmem [#allocation1], 16
    %135 = vst [vmem:[%s134] ss:$2 sm:$0xff] %v76
    %v136 = vld.sshfl [vmem:[#allocation1 + $0x10] sm:$0xff pattern:$0x75316420]
    %v137 = vld.sshfl [vmem:[#allocation1 + $0x18] sm:$0xff pattern:$0x75316420]
    %vm142 = vcmask 1043456
    %v143 = vsel %vm142, %v132, -inf
    %v144 = vrot.slane %v143, 4
    %v145 = vmax.f32 %v143, %v144
    %v146 = vrot.slane %v145, 2
    %v147 = vmax.f32 %v145, %v146
    %v148 = vrot.slane %v147, 1
    %v149 = vmax.f32 %v147, %v148
    %v150 = vsel %vm142, %v133, -inf
    %v151 = vrot.slane %v150, 4
    %v152 = vmax.f32 %v150, %v151
    %v153 = vrot.slane %v152, 2
    %v154 = vmax.f32 %v152, %v153
    %v155 = vrot.slane %v154, 1
    %v156 = vmax.f32 %v154, %v155
    %v157 = vsel %vm142, %v136, -inf
    %v158 = vrot.slane %v157, 4
    %v159 = vmax.f32 %v157, %v158
    %v160 = vrot.slane %v159, 2
    %v161 = vmax.f32 %v159, %v160
    %v162 = vrot.slane %v161, 1
    %v163 = vmax.f32 %v161, %v162
    %v164 = vsel %vm142, %v137, -inf
    %v165 = vrot.slane %v164, 4
    %v166 = vmax.f32 %v164, %v165
    %v167 = vrot.slane %v166, 2
    %v168 = vmax.f32 %v166, %v167
    %v169 = vrot.slane %v168, 1
    %v170 = vmax.f32 %v168, %v169
    %v175 = vrot.slane %v156, 4
    %v176 = vrot.slane %v170, 4
    %v177 = vsel %vm142, %v149, %v175
    %v178 = vsel %vm142, %v163, %v176
    %v181 = vsub.f32 %v75, %v177
    %v182 = vsub.f32 %v76, %v178
    %v183 = vmul.f32 %v181, 1.442695
    %v184 = vpow.pop %v183
    %v185 = vmul.f32 %v182, 1.442695
    %v186 = vpow.pop %v185
    %189 = vst [vmem:[#allocation1] ss:$2 sm:$0xff] %v184
    %v190 = vld.sshfl [vmem:[#allocation1] sm:$0xff pattern:$0x75316420]
    %v191 = vld.sshfl [vmem:[#allocation1 + $0x8] sm:$0xff pattern:$0x75316420]
    %s192 = scalar_lea.vmem [#allocation1], 16
    %193 = vst [vmem:[%s192] ss:$2 sm:$0xff] %v186
    %v194 = vld.sshfl [vmem:[#allocation1 + $0x10] sm:$0xff pattern:$0x75316420]
    %v195 = vld.sshfl [vmem:[#allocation1 + $0x18] sm:$0xff pattern:$0x75316420]
    %v200 = vsel %vm142, %v190, 0.0
    %v201 = vrot.slane %v200, 4
    %v202 = vadd.f32 %v200, %v201
    %v203 = vrot.slane %v202, 2
    %v204 = vadd.f32 %v202, %v203
    %v205 = vrot.slane %v204, 1
    %v206 = vadd.f32 %v204, %v205
    %v207 = vsel %vm142, %v191, 0.0
    %v208 = vrot.slane %v207, 4
    %v209 = vadd.f32 %v207, %v208
    %v210 = vrot.slane %v209, 2
    %v211 = vadd.f32 %v209, %v210
    %v212 = vrot.slane %v211, 1
    %v213 = vadd.f32 %v211, %v212
    %v214 = vsel %vm142, %v194, 0.0
    %v215 = vrot.slane %v214, 4
    %v216 = vadd.f32 %v214, %v215
    %v217 = vrot.slane %v216, 2
    %v218 = vadd.f32 %v216, %v217
    %v219 = vrot.slane %v218, 1
    %v220 = vadd.f32 %v218, %v219
    %v221 = vsel %vm142, %v195, 0.0
    %v222 = vrot.slane %v221, 4
    %v223 = vadd.f32 %v221, %v222
    %v224 = vrot.slane %v223, 2
    %v225 = vadd.f32 %v223, %v224
    %v226 = vrot.slane %v225, 1
    %v227 = vadd.f32 %v225, %v226
    %v228 = vrcp.pop %v206
    %v229 = vmul.f32 %v206, %v228
    %v230 = vsub.f32 1.0, %v229
    %v231 = vmul.f32 %v228, %v230
    %v232 = vadd.f32 %v228, %v231
    %vm233 = vweird.f32 %v206
    %vm234 = vweird.f32 %v228
    %vm235 = vmor %vm233, %vm234
    %v236 = vsel %vm235, %v228, %v232
    %v237 = vand.u32 2147483647, %v206
    %vm238 = vcmp.eq.f32.partialorder %v237, 8.507059e+37
    %v239 = vand.u32 %v206, 2147483648
    %v240 = vor.u32 1.1754944e-38, %v239
    %v241 = vsel %vm238, %v240, %v236
    %v242 = vrcp.pop %v213
    %v243 = vmul.f32 %v213, %v242
    %v244 = vsub.f32 1.0, %v243
    %v245 = vmul.f32 %v242, %v244
    %v246 = vadd.f32 %v242, %v245
    %vm247 = vweird.f32 %v213
    %vm248 = vweird.f32 %v242
    %vm249 = vmor %vm247, %vm248
    %v250 = vsel %vm249, %v242, %v246
    %v251 = vand.u32 2147483647, %v213
    %vm252 = vcmp.eq.f32.partialorder %v251, 8.507059e+37
    %v253 = vand.u32 %v213, 2147483648
    %v254 = vor.u32 1.1754944e-38, %v253
    %v255 = vsel %vm252, %v254, %v250
    %v256 = vrcp.pop %v220
    %v257 = vmul.f32 %v220, %v256
    %v258 = vsub.f32 1.0, %v257
    %v259 = vmul.f32 %v256, %v258
    %v260 = vadd.f32 %v256, %v259
    %vm261 = vweird.f32 %v220
    %vm262 = vweird.f32 %v256
    %vm263 = vmor %vm261, %vm262
    %v264 = vsel %vm263, %v256, %v260
    %v265 = vand.u32 2147483647, %v220
    %vm266 = vcmp.eq.f32.partialorder %v265, 8.507059e+37
    %v267 = vand.u32 %v220, 2147483648
    %v268 = vor.u32 1.1754944e-38, %v267
    %v269 = vsel %vm266, %v268, %v264
    %v270 = vrcp.pop %v227
    %v271 = vmul.f32 %v227, %v270
    %v272 = vsub.f32 1.0, %v271
    %v273 = vmul.f32 %v270, %v272
    %v274 = vadd.f32 %v270, %v273
    %vm275 = vweird.f32 %v227
    %vm276 = vweird.f32 %v270
    %vm277 = vmor %vm275, %vm276
    %v278 = vsel %vm277, %v270, %v274
    %v279 = vand.u32 2147483647, %v227
    %vm280 = vcmp.eq.f32.partialorder %v279, 8.507059e+37
    %v281 = vand.u32 %v227, 2147483648
    %v282 = vor.u32 1.1754944e-38, %v281
    %v283 = vsel %vm280, %v282, %v278
    %v288 = vrot.slane %v255, 4
    %v289 = vrot.slane %v283, 4
    %v290 = vsel %vm142, %v241, %v288
    %v291 = vsel %vm142, %v269, %v289
    %v294 = vmul.f32 %v184, %v290
    %v295 = vmul.f32 %v186, %v291
    %v296 = vsub.f32 1.0, %v294
    %v297 = vsub.f32 1.0, %v295
    %300 = vst [vmem:[#allocation1] ss:$2 sm:$0xff] %v294
    %v301 = vld.sshfl [vmem:[#allocation1] sm:$0xff pattern:$0x75316420]
    %v302 = vld.sshfl [vmem:[#allocation1 + $0x8] sm:$0xff pattern:$0x75316420]
    %s303 = scalar_lea.vmem [#allocation1], 16
    %304 = vst [vmem:[%s303] ss:$2 sm:$0xff] %v295
    %v305 = vld.sshfl [vmem:[#allocation1 + $0x10] sm:$0xff pattern:$0x75316420]
    %v306 = vld.sshfl [vmem:[#allocation1 + $0x18] sm:$0xff pattern:$0x75316420]
    %313 = vst [vmem:[#allocation1] ss:$2 sm:$0xff] %v296
    %v314 = vld.sshfl [vmem:[#allocation1] sm:$0xff pattern:$0x75316420]
    %v315 = vld.sshfl [vmem:[#allocation1 + $0x8] sm:$0xff pattern:$0x75316420]
    %s316 = scalar_lea.vmem [#allocation1], 16
    %317 = vst [vmem:[%s316] ss:$2 sm:$0xff] %v297
    %v318 = vld.sshfl [vmem:[#allocation1 + $0x10] sm:$0xff pattern:$0x75316420]
    %v319 = vld.sshfl [vmem:[#allocation1 + $0x18] sm:$0xff pattern:$0x75316420]
    %v324 = vsel %vm125, %v301, %v314
    %v325 = vsel %vm126, %v302, %v315
    %v326 = vsel %vm127, %v305, %v318
    %v327 = vsel %vm128, %v306, %v319
    %v328 = vsub.f32 1.0, %v324
    %v329 = vsub.f32 1.0, %v325
    %v330 = vsub.f32 1.0, %v326
    %v331 = vsub.f32 1.0, %v327
    %v332 = vmul.f32 %v328, %v328
    %v333 = vmul.f32 %v329, %v329
    %v334 = vmul.f32 %v330, %v330
    %v335 = vmul.f32 %v331, %v331
    %v336 = vsel %vm125, -0.25, -0.75
    %v337 = vsel %vm126, -0.25, -0.75
    %v338 = vsel %vm127, -0.25, -0.75
    %v339 = vsel %vm128, -0.25, -0.75
    %v340 = vmul.f32 %v336, %v332
    %v341 = vmul.f32 %v337, %v333
    %v342 = vmul.f32 %v338, %v334
    %v343 = vmul.f32 %v339, %v335
    %v344 = vadd.f32 %v324, 1e-08
    %v345 = vadd.f32 %v325, 1e-08
    %v346 = vadd.f32 %v326, 1e-08
    %v347 = vadd.f32 %v327, 1e-08
    %v348 = vlog2.pop %v344
    %v349 = vmul.f32 %v348, 0.6931472
    %v350 = vlog2.pop %v345
    %v351 = vmul.f32 %v350, 0.6931472
    %v352 = vlog2.pop %v346
    %v353 = vmul.f32 %v352, 0.6931472
    %v354 = vlog2.pop %v347
    %v355 = vmul.f32 %v354, 0.6931472
    %v356 = vmul.f32 %v340, %v349
    %v357 = vmul.f32 %v341, %v351
    %v358 = vmul.f32 %v342, %v353
    %v359 = vmul.f32 %v343, %v355
    %v360 = vsel %vm99, 1, 0
    %v361 = vrot.slane %v360, 1
    %v362 = vrot.slane %v360, 2
    %v363 = vrot.slane %v360, 3
    %v364 = vsel %vm109, %v360, %v361
    %v365 = vsel %vm111, %v362, %v363
    %v366 = vsel %vm96, %v364, %v365
    %v367 = vsel %vm114, %v360, %v361
    %v368 = vsel %vm116, %v362, %v363
    %v369 = vsel %vm118, %v367, %v368
    %v370 = vrot.slane %v369, 1
    %vm371 = vcmp.ne.s32.totalorder %v366, 0
    %vm372 = vcmp.ne.s32.totalorder %v370, 0
    %v373 = vsel %vm371, 1, 0
    %v374 = vsel %vm372, 1, 0
    %v375 = vperm.slane %v373, 0
    %v376 = vperm.slane %v373, 1
    %v377 = vperm.slane %v374, 0
    %v378 = vperm.slane %v374, 1
    %vm379 = vcmp.eq.s32.totalorder %v375, 1
    %vm380 = vcmp.eq.s32.totalorder %v376, 1
    %vm381 = vcmp.eq.s32.totalorder %v377, 1
    %vm382 = vcmp.eq.s32.totalorder %v378, 1
    %v383 = vsel %vm379, %v356, 0.0
    %v384 = vsel %vm380, %v357, 0.0
    %v385 = vsel %vm381, %v358, 0.0
    %v386 = vsel %vm382, %v359, 0.0
    %v387 = vld [vmem:[#allocation7] sm:$0xff]
    %v388 = vsel %vm142, %v383, 0.0
    %v389 = vsel %vm142, %v385, 0.0
    %v390 = vadd.f32 %v388, %v389
    %v391 = vsel %vm142, %v384, 0.0
    %v392 = vsel %vm142, %v386, 0.0
    %v393 = vadd.f32 %v391, %v392
    %v396 = vrot.slane %v393, 4
    %v397 = vsel %vm142, %v390, %v396
    %v399 = vadd.f32 %v387, %v397
    %400 = vst [vmem:[#allocation7] sm:$0xff] %v399
    %v401 = vld [vmem:[#allocation8] sm:$0x3]
    %v402 = vcvt.s32.f32 %v360
    %404 = vst [vmem:[#allocation1] ss:$4 sm:$0xff] %v402
    %v405 = vld.sshfl [vmem:[#allocation1] sm:$0xff pattern:$0x73625140]
    %v406 = vld.sshfl [vmem:[#allocation1 + $0x8] sm:$0xff pattern:$0x73625140]
    %v409 = vsel %vm96, %v405, 0.0
    %v410 = vrot.slane %v409, 4
    %v411 = vadd.f32 %v409, %v410
    %v412 = vrot.slane %v411, 2
    %v413 = vadd.f32 %v411, %v412
    %v414 = vrot.slane %v413, 1
    %v415 = vadd.f32 %v413, %v414
    %v416 = vsel %vm96, %v406, 0.0
    %v417 = vrot.slane %v416, 4
    %v418 = vadd.f32 %v416, %v417
    %v419 = vrot.slane %v418, 2
    %v420 = vadd.f32 %v418, %v419
    %v421 = vrot.slane %v420, 1
    %v422 = vadd.f32 %v420, %v421
    %v425 = vrot.slane %v422, 7
    %v426 = vsel %vm109, %v415, %v425
    %v428 = vadd.f32 %v401, %v426
    %v429 = vlaneseq
    %vm430 = vcmp.ge.s32.totalorder %v429, 0
    %vm431 = vcmp.lt.s32.totalorder %v429, 256
    %vm432 = vmand %vm430, %vm431
    %433 = vst.msk [vmem:[#allocation8] sm:$0x3] %vm432, %v428
    // Predicated region
    $region22: #{tpu_custom_call.1} parent=1 // pred_check
      _
    $region23: #{tpu_custom_call.1} parent=1 // pred_check_branch
      %435 = sbr.rel (0) target = $region25
    $region24: #{tpu_custom_call.1} parent=1 // pred_region
      %437 = vsyncadd [#allocation4], 0
      %s439 = sshll.u32 [#allocation7], 4
      %s440 = int_to_ptr.vmem [resolvable:$true] %s439
      %s441 = sshll.u32 %s2, 4
      %s442 = int_to_ptr.hbm [resolvable:$true] %s441
      %444 = dma.vmem_to_hbm [thread:$0]  %s440, 128, %s442, [#allocation4]
    $region25: #{tpu_custom_call.1} parent=1 // pred_fallthru
      _
    // Predicated region
    $region26: #{tpu_custom_call.1} parent=1 // pred_check
      _
    $region27: #{tpu_custom_call.1} parent=1 // pred_check_branch
      %446 = sbr.rel (0) target = $region29
    $region28: #{tpu_custom_call.1} parent=1 // pred_region
      %448 = vsyncadd [#allocation9], 0
      %s450 = sshll.u32 [#allocation8], 4
      %s451 = int_to_ptr.vmem [resolvable:$true] %s450
      %s452 = sshll.u32 %s3, 4
      %s453 = int_to_ptr.hbm [resolvable:$true] %s452
      %455 = dma.vmem_to_hbm [thread:$0]  %s451, 32, %s453, [#allocation9]
    $region29: #{tpu_custom_call.1} parent=1 // pred_fallthru
      _
    // Predicated region
    $region30: #{tpu_custom_call.1} parent=1 // pred_check
      _
    $region31: #{tpu_custom_call.1} parent=1 // pred_check_branch
      %457 = sbr.rel (0) target = $region33
    $region32: #{tpu_custom_call.1} parent=1 // pred_region
      %459 = dma.done [#allocation4], 128
    $region33: #{tpu_custom_call.1} parent=1 // pred_fallthru
      _
    // Predicated region
    $region34: #{tpu_custom_call.1} parent=1 // pred_check
      _
    $region35: #{tpu_custom_call.1} parent=1 // pred_check_branch
      %461 = sbr.rel (0) target = $region37
    $region36: #{tpu_custom_call.1} parent=1 // pred_region
      %463 = dma.done [#allocation9], 32
    $region37: #{tpu_custom_call.1} parent=1 // pred_fallthru
      _
    %464 = vsyncpa [#allocation3], 1
    %465 = vsyncpa [#allocation6], 1
    %466 = vsyncpa [#allocation4], 1
    %467 = vsyncpa [#allocation9], 1

</llo_original>
